<compile_context>
chip_gen: v7x
topology: tpu7x:2x2x1
jax: 0.10.0
libtpu: 0.0.40
codegen_flags: <defaults>
</compile_context>

<pallas_src>
import jax
import jax.numpy as jnp
from jax.experimental import pallas as pl
from jax.experimental.pallas import tpu as pltpu


def pose_extractor_kernel(x_ref, w1_ref, b1_ref, w2_ref, b2_ref, o_ref):
    # mlp1 + relu : (tm, 7)f32 @ (7, 256)f32 -> f32, +b1, relu, cast once to bf16.
    h = jnp.dot(x_ref[...], w1_ref[...], preferred_element_type=jnp.float32)
    h = jnp.maximum(h + b1_ref[...], 0.0).astype(jnp.bfloat16)
    # mlp2 + relu : (tm, 256)bf16 @ (256, 128)bf16 -> f32 acc, +b2, relu.
    o = jnp.dot(h, w2_ref[...], preferred_element_type=jnp.float32)
    o_ref[...] = jnp.maximum(o + b2_ref[...], 0.0).astype(o_ref.dtype)


def pose_extractor(x, w1, b1, w2, b2, *, tm=4096, out_dtype=jnp.float32):
    """x: [N, 7] float32. Returns [N, 128] `out_dtype`.

    w1: [7, 256], b1: [1, 256], w2: [256, 128], b2: [1, 128]  (float32)
    """
    N, D_in = x.shape
    assert D_in == 7
    H1 = w1.shape[1]   # 256
    H2 = w2.shape[1]   # 128

    # Row tiling:
    #  - N <= 8: one block covering the whole array (block dim == full dim is
    #    always legal, no 8-row divisibility needed).
    #  - otherwise: multiple-of-8 tile, capped both by `tm` and by ~N/2 so the
    #    "parallel" grid has >=2 steps (v7x megacore actually gets used).
    #    The last block may be ragged; Pallas masks its out-of-bounds stores.
    if N <= 8:
        tm_eff = N
    else:
        half = pl.cdiv(N, 2)
        tm_eff = min(tm, ((half + 7) // 8) * 8)
    grid = (pl.cdiv(N, tm_eff),)

    # Only the (tiny) second-layer weight is pre-cast to bf16; x and w1 stay f32.
    w2_bf = w2.astype(jnp.bfloat16)

    out = pl.pallas_call(
        pose_extractor_kernel,
        out_shape=jax.ShapeDtypeStruct((N, H2), out_dtype),
        grid_spec=pltpu.PrefetchScalarGridSpec(
            num_scalar_prefetch=0,
            grid=grid,
            in_specs=[
                pl.BlockSpec((tm_eff, D_in), lambda i: (i, 0)),  # x tile (f32)
                pl.BlockSpec((D_in, H1), lambda i: (0, 0)),      # w1 (whole, f32)
                pl.BlockSpec((1, H1), lambda i: (0, 0)),         # b1 (f32)
                pl.BlockSpec((H1, H2), lambda i: (0, 0)),        # w2 (whole, bf16)
                pl.BlockSpec((1, H2), lambda i: (0, 0)),         # b2 (f32)
            ],
            out_specs=pl.BlockSpec((tm_eff, H2), lambda i: (i, 0)),
        ),
        compiler_params=pltpu.CompilerParams(
            # shards the row grid across v7x's 2 TensorCores when grid >= 2
            dimension_semantics=("parallel",),
            # tm=4096 needs ~16-17 MiB of VMEM (double-buffered x/out + h);
            # raise the scoped limit so v5e's 16 MiB default is not a blocker.
            vmem_limit_bytes=48 * 1024 * 1024,
        ),
    )(x, w1, b1, w2_bf, b2)

    return out


def _init_linear(key, fan_in, fan_out):
    # Mimic PyTorch nn.Linear default init: U(-1/sqrt(fan_in), 1/sqrt(fan_in))
    kw, kb = jax.random.split(key)
    bound = 1.0 / jnp.sqrt(jnp.float32(fan_in))
    w = jax.random.uniform(kw, (fan_in, fan_out), jnp.float32, -bound, bound)
    b = jax.random.uniform(kb, (1, fan_out), jnp.float32, -bound, bound)
    return w, b


def _ref(x_flat, w1, b1, w2, b2):
    r = jnp.maximum(x_flat @ w1 + b1, 0.0)
    return jnp.maximum(r @ w2 + b2, 0.0)


if __name__ == "__main__":
    key = jax.random.PRNGKey(0)
    kx, k1, k2, kr = jax.random.split(key, 4)

    # small shapes implied by the module: pose vectors of dim 7
    batch, seq = 2, 8                      # -> 16 rows total
    x = jax.random.normal(kx, (batch, seq, 7), jnp.float32)

    w1, b1 = _init_linear(k1, 7, 256)      # mlp1
    w2, b2 = _init_linear(k2, 256, 128)    # mlp2

    x_flat = x.reshape(batch * seq, 7)     # glue reshape in plain JAX
    out = pose_extractor(x_flat, w1, b1, w2, b2)
    out = out.reshape(batch, seq, 128)
    jax.block_until_ready(out)

    # reference check (layer 2 runs in bf16 w/ f32 acc -> loose-ish tolerance)
    ref = _ref(x_flat, w1, b1, w2, b2).reshape(batch, seq, 128)
    assert jnp.allclose(out, ref, atol=5e-2, rtol=5e-2), "mismatch vs reference"

    # ragged-N check: N not a multiple of the tile -> exercises the masked
    # last block (no wrapper pad / slice anymore).
    x_rag = jax.random.normal(kr, (37, 7), jnp.float32)
    out_rag = pose_extractor(x_rag, w1, b1, w2, b2)
    jax.block_until_ready(out_rag)
    ref_rag = _ref(x_rag, w1, b1, w2, b2)
    assert out_rag.shape == (37, 128)
    assert jnp.allclose(out_rag, ref_rag, atol=5e-2, rtol=5e-2), "ragged mismatch"

    print("KERNEL_OK")
</pallas_src>

<mosaic_0001>
module attributes {stable_mosaic.version = 11 : i64} {
  func.func @pose_extractor_kernel(%arg0: i32, %arg1: memref<8x7xf32, #tpu.memory_space<vmem>>, %arg2: memref<7x256xf32, #tpu.memory_space<vmem>>, %arg3: memref<1x256xf32, #tpu.memory_space<vmem>>, %arg4: memref<256x128xbf16, #tpu.memory_space<vmem>>, %arg5: memref<1x128xf32, #tpu.memory_space<vmem>>, %arg6: memref<8x128xf32, #tpu.memory_space<vmem>>) attributes {dimension_semantics = [#tpu.dimension_semantics<parallel>], iteration_bounds = array<i64: 2>, scalar_prefetch = 0 : i64, scratch_operands = 0 : i64, tpu.core_type = #tpu.core_type<tc>, window_params = [{transform_indices = @transform_0, window_bounds = array<i64: 8, 7>}, {pipeline_mode = #tpu.pipeline_mode<synchronous>, transform_indices = @transform_1, window_bounds = array<i64: 7, 256>}, {pipeline_mode = #tpu.pipeline_mode<synchronous>, transform_indices = @transform_2, window_bounds = array<i64: 1, 256>}, {pipeline_mode = #tpu.pipeline_mode<synchronous>, transform_indices = @transform_3, window_bounds = array<i64: 256, 128>}, {pipeline_mode = #tpu.pipeline_mode<synchronous>, transform_indices = @transform_4, window_bounds = array<i64: 1, 128>}, {transform_indices = @transform_5, window_bounds = array<i64: 8, 128>}]} {
    %c0 = arith.constant 0 : index
    %c0_0 = arith.constant 0 : index
    %0 = vector.load %arg1[%c0, %c0_0] : memref<8x7xf32, #tpu.memory_space<vmem>>, vector<8x7xf32>
    %c0_1 = arith.constant 0 : index
    %c0_2 = arith.constant 0 : index
    %1 = vector.load %arg2[%c0_1, %c0_2] : memref<7x256xf32, #tpu.memory_space<vmem>>, vector<7x256xf32>
    %cst = arith.constant dense<0.000000e+00> : vector<8x256xf32>
    %2 = tpu.matmul %0, %1, %cst {dimension_numbers = #tpu.dot_dimension_numbers<[1], [0], [0], [1], [0, 0, 1, 1], [], []>} : vector<8x7xf32>, vector<7x256xf32>, vector<8x256xf32> -> vector<8x256xf32>
    %c0_3 = arith.constant 0 : index
    %c0_4 = arith.constant 0 : index
    %3 = vector.load %arg3[%c0_3, %c0_4] : memref<1x256xf32, #tpu.memory_space<vmem>>, vector<1x256xf32>
    %4 = vector.broadcast %3 : vector<1x256xf32> to vector<8x256xf32>
    %5 = arith.addf %2, %4 : vector<8x256xf32>
    %cst_5 = arith.constant 0.000000e+00 : f32
    %6 = vector.broadcast %cst_5 : f32 to vector<8x256xf32>
    %7 = arith.maximumf %5, %6 : vector<8x256xf32>
    %8 = arith.truncf %7 : vector<8x256xf32> to vector<8x256xbf16>
    %c0_6 = arith.constant 0 : index
    %c0_7 = arith.constant 0 : index
    %9 = vector.load %arg4[%c0_6, %c0_7] : memref<256x128xbf16, #tpu.memory_space<vmem>>, vector<256x128xbf16>
    %cst_8 = arith.constant dense<0.000000e+00> : vector<8x128xf32>
    %10 = tpu.matmul %8, %9, %cst_8 {dimension_numbers = #tpu.dot_dimension_numbers<[1], [0], [0], [1], [0, 0, 1, 1], [], []>} : vector<8x256xbf16>, vector<256x128xbf16>, vector<8x128xf32> -> vector<8x128xf32>
    %c0_9 = arith.constant 0 : index
    %c0_10 = arith.constant 0 : index
    %11 = vector.load %arg5[%c0_9, %c0_10] : memref<1x128xf32, #tpu.memory_space<vmem>>, vector<1x128xf32>
    %12 = vector.broadcast %11 : vector<1x128xf32> to vector<8x128xf32>
    %13 = arith.addf %10, %12 : vector<8x128xf32>
    %cst_11 = arith.constant 0.000000e+00 : f32
    %14 = vector.broadcast %cst_11 : f32 to vector<8x128xf32>
    %15 = arith.maximumf %13, %14 : vector<8x128xf32>
    %c0_12 = arith.constant 0 : index
    %c0_13 = arith.constant 0 : index
    %16 = vector.load %arg6[%c0_12, %c0_13] : memref<8x128xf32, #tpu.memory_space<vmem>>, vector<8x128xf32>
    tpu.vector_store %arg6[%c0_12, %c0_13], %15 {strides = array<i32>} : memref<8x128xf32, #tpu.memory_space<vmem>>, vector<8x128xf32>,
    return
  }
  func.func @transform_0(%arg0: i32) -> (i32, i32) {
    %c0_i32 = arith.constant 0 : i32
    %c0_i32_0 = arith.constant 0 : i32
    return %arg0, %c0_i32 : i32, i32
  }
  func.func @transform_1(%arg0: i32) -> (i32, i32) {
    %c0_i32 = arith.constant 0 : i32
    %c0_i32_0 = arith.constant 0 : i32
    %c0_i32_1 = arith.constant 0 : i32
    return %c0_i32, %c0_i32_0 : i32, i32
  }
  func.func @transform_2(%arg0: i32) -> (i32, i32) {
    %c0_i32 = arith.constant 0 : i32
    %c0_i32_0 = arith.constant 0 : i32
    %c0_i32_1 = arith.constant 0 : i32
    return %c0_i32, %c0_i32_0 : i32, i32
  }
  func.func @transform_3(%arg0: i32) -> (i32, i32) {
    %c0_i32 = arith.constant 0 : i32
    %c0_i32_0 = arith.constant 0 : i32
    %c0_i32_1 = arith.constant 0 : i32
    return %c0_i32, %c0_i32_0 : i32, i32
  }
  func.func @transform_4(%arg0: i32) -> (i32, i32) {
    %c0_i32 = arith.constant 0 : i32
    %c0_i32_0 = arith.constant 0 : i32
    %c0_i32_1 = arith.constant 0 : i32
    return %c0_i32, %c0_i32_0 : i32, i32
  }
  func.func @transform_5(%arg0: i32) -> (i32, i32) {
    %c0_i32 = arith.constant 0 : i32
    %c0_i32_0 = arith.constant 0 : i32
    return %arg0, %c0_i32 : i32, i32
  }
}

</mosaic_0001>

<llo_original>
// kernel: tpu_custom_call.1
$region0: #{tpu_custom_call.1}
  #allocation0 [shape = 'u32[]', space=smem, size = 0x4, offset = 0x4, fixed_abs, tag = 'smem constant byte address 0x4 - core index']
  #allocation1 [shape = 'u32[144,128]{1,0:T(1,128)}', space=vmem, size = 0x12000, scoped, tag = 'internal scratch']
  %s0 = inlined_call_operand.vmem [shape: f32[16,7], index: 0, kind: input, shape index: {}]
  %s1 = inlined_call_operand.vmem [shape: f32[7,256], index: 1, kind: input, shape index: {}]
  %s2 = inlined_call_operand.vmem [shape: f32[1,256], index: 2, kind: input, shape index: {}]
  %s3 = inlined_call_operand.hbm [shape: bf16[256,128], index: 3, kind: input, shape index: {}]
  %s4 = inlined_call_operand.vmem [shape: f32[1,128], index: 4, kind: input, shape index: {}]
  %s5 = inlined_call_operand.hbm [shape: f32[16,128], index: 5, kind: output, shape index: {}]
  %s6 = sld [smem:[#allocation0]]
  $region57: #{tpu_custom_call.1} parent=0
    _
  %s8 = ssub.s32 1, %s6
  %s9 = scalar_select 0, %s8, %s6
  $region1: #{tpu_custom_call.1} parent=0
    #allocation2 [shape = 'u8[65536]{0}', space=vmem, size = 0x10000, scoped, tag = 'input window, operand 3, single buffered']
    #allocation3 [shape = 's32[2]{0}', space=sflag, size = 0x8, scoped, tag = 'scoped memory for tpu_custom_call.1']
    #allocation4 [shape = 's32[2]{0}', space=sflag, size = 0x8, scoped, tag = 'scoped memory for tpu_custom_call.1']
    #allocation5 [shape = 'u8[8192]{0}', space=vmem, size = 0x2000, scoped, tag = 'output window, operand 0']
    %10 = vsyncpa [#allocation3], 0
    %11 = vsyncpa [#allocation4], 0
    %s12 = scalar_lea.sflag [#allocation4], 1
    %13 = vsyncpa %s12, 0
    loop: start=0, step=1, limit=4
    $region2: #{tpu_custom_call.1} parent=1 // loop_pre_header
      _
    $region3: #{tpu_custom_call.1} parent=1 // loop_header
      %s15 = sphi 0, %s19
      %p16 = scmp.ge.s32.totalorder %s15, 4
      %s25 = sphi 0, %s27
      %s28 = sphi 0, %s25
      %s29 = sphi 0, %s28
      %s45 = sphi 0, %s29
      %s49 = sphi 0, %s49
      %s51 = sphi 0, %s49
      %s52 = sphi 0, %s51
      %s66 = sphi 0, %s52
      %s70 = sphi 0, %s70
      %s72 = sphi 0, %s70
      %s73 = sphi 0, %s72
      %s87 = sphi 0, %s73
      %s91 = sphi 0, %s91
      %s93 = sphi 0, %s91
      %s94 = sphi 0, %s93
      %s108 = sphi 0, %s94
      %s112 = sphi 0, %s112
      %s114 = sphi 0, %s112
      %s115 = sphi 0, %s114
      %s129 = sphi 0, %s115
      %s135 = sphi 0, %s137
      %s138 = sphi 0, %s135
      %s139 = sphi 0, %s138
      %s155 = sphi 0, %s139
    $region4: #{tpu_custom_call.1} parent=1 // loop_header_branch
      %18 = sbr.rel (%p16) target = $region8
    $region5: #{tpu_custom_call.1} parent=1 // loop_body
      %s20 = ssub.s32 %s15, 1
      %s21 = ssub.s32 %s15, 2
      %s22 = sadd.s32 %s15, 1
      %s23 = ssub.s32 %s15, %s22
      %p24 = scmp.eq.s32.totalorder %s23, 0
      %s26 = sadd.s32 %s25, 1
      %s27 = scalar_select %p24, %s25, %s26
      %p30 = pneg %p24
      %p31 = scmp.eq.s32.totalorder %s15, 1
      %p32 = por %p30, %p31
      %p33 = scmp.ne.s32.totalorder %s25, %s28
      %p34 = scmp.eq.s32.totalorder %s15, 0
      %p35 = por %p33, %p34
      %p36 = scmp.ne.s32.totalorder %s25, %s28
      %p37 = scmp.eq.s32.totalorder %s20, 1
      %p38 = por %p36, %p37
      %p39 = scmp.ne.s32.totalorder %s28, %s29
      %p40 = scmp.eq.s32.totalorder %s20, 0
      %p41 = por %p39, %p40
      %p42 = scmp.ne.s32.totalorder %s28, %s29
      %p43 = scmp.eq.s32.totalorder %s21, 1
      %p44 = por %p42, %p43
      %p46 = scmp.ne.s32.totalorder %s29, %s45
      %p47 = scmp.eq.s32.totalorder %s21, 0
      %p48 = por %p46, %p47
      %s50 = sadd.s32 %s49, 1
      %p53 = scmp.eq.s32.totalorder %s15, 1
      %p54 = scmp.ne.s32.totalorder %s49, %s51
      %p55 = scmp.eq.s32.totalorder %s15, 0
      %p56 = por %p54, %p55
      %p57 = scmp.ne.s32.totalorder %s49, %s51
      %p58 = scmp.eq.s32.totalorder %s20, 1
      %p59 = por %p57, %p58
      %p60 = scmp.ne.s32.totalorder %s51, %s52
      %p61 = scmp.eq.s32.totalorder %s20, 0
      %p62 = por %p60, %p61
      %p63 = scmp.ne.s32.totalorder %s51, %s52
      %p64 = scmp.eq.s32.totalorder %s21, 1
      %p65 = por %p63, %p64
      %p67 = scmp.ne.s32.totalorder %s52, %s66
      %p68 = scmp.eq.s32.totalorder %s21, 0
      %p69 = por %p67, %p68
      %s71 = sadd.s32 %s70, 1
      %p74 = scmp.eq.s32.totalorder %s15, 1
      %p75 = scmp.ne.s32.totalorder %s70, %s72
      %p76 = scmp.eq.s32.totalorder %s15, 0
      %p77 = por %p75, %p76
      %p78 = scmp.ne.s32.totalorder %s70, %s72
      %p79 = scmp.eq.s32.totalorder %s20, 1
      %p80 = por %p78, %p79
      %p81 = scmp.ne.s32.totalorder %s72, %s73
      %p82 = scmp.eq.s32.totalorder %s20, 0
      %p83 = por %p81, %p82
      %p84 = scmp.ne.s32.totalorder %s72, %s73
      %p85 = scmp.eq.s32.totalorder %s21, 1
      %p86 = por %p84, %p85
      %p88 = scmp.ne.s32.totalorder %s73, %s87
      %p89 = scmp.eq.s32.totalorder %s21, 0
      %p90 = por %p88, %p89
      %s92 = sadd.s32 %s91, 1
      %p95 = scmp.eq.s32.totalorder %s15, 1
      %p96 = scmp.ne.s32.totalorder %s91, %s93
      %p97 = scmp.eq.s32.totalorder %s15, 0
      %p98 = por %p96, %p97
      %p99 = scmp.ne.s32.totalorder %s91, %s93
      %p100 = scmp.eq.s32.totalorder %s20, 1
      %p101 = por %p99, %p100
      %p102 = scmp.ne.s32.totalorder %s93, %s94
      %p103 = scmp.eq.s32.totalorder %s20, 0
      %p104 = por %p102, %p103
      %p105 = scmp.ne.s32.totalorder %s93, %s94
      %p106 = scmp.eq.s32.totalorder %s21, 1
      %p107 = por %p105, %p106
      %p109 = scmp.ne.s32.totalorder %s94, %s108
      %p110 = scmp.eq.s32.totalorder %s21, 0
      %p111 = por %p109, %p110
      %s113 = sadd.s32 %s112, 1
      %p116 = scmp.eq.s32.totalorder %s15, 1
      %p117 = scmp.ne.s32.totalorder %s112, %s114
      %p118 = scmp.eq.s32.totalorder %s15, 0
      %p119 = por %p117, %p118
      %p120 = scmp.ne.s32.totalorder %s112, %s114
      %p121 = scmp.eq.s32.totalorder %s20, 1
      %p122 = por %p120, %p121
      %p123 = scmp.ne.s32.totalorder %s114, %s115
      %p124 = scmp.eq.s32.totalorder %s20, 0
      %p125 = por %p123, %p124
      %p126 = scmp.ne.s32.totalorder %s114, %s115
      %p127 = scmp.eq.s32.totalorder %s21, 1
      %p128 = por %p126, %p127
      %p130 = scmp.ne.s32.totalorder %s115, %s129
      %p131 = scmp.eq.s32.totalorder %s21, 0
      %p132 = por %p130, %p131
      %s133 = ssub.s32 %s15, %s22
      %p134 = scmp.eq.s32.totalorder %s133, 0
      %s136 = sadd.s32 %s135, 1
      %s137 = scalar_select %p134, %s135, %s136
      %p140 = pneg %p134
      %p141 = scmp.eq.s32.totalorder %s15, 1
      %p142 = por %p140, %p141
      %p143 = scmp.ne.s32.totalorder %s135, %s138
      %p144 = scmp.eq.s32.totalorder %s15, 0
      %p145 = por %p143, %p144
      %p146 = scmp.ne.s32.totalorder %s135, %s138
      %p147 = scmp.eq.s32.totalorder %s20, 1
      %p148 = por %p146, %p147
      %p149 = scmp.ne.s32.totalorder %s138, %s139
      %p150 = scmp.eq.s32.totalorder %s20, 0
      %p151 = por %p149, %p150
      %p152 = scmp.ne.s32.totalorder %s138, %s139
      %p153 = scmp.eq.s32.totalorder %s21, 1
      %p154 = por %p152, %p153
      %p156 = scmp.ne.s32.totalorder %s139, %s155
      %p157 = scmp.eq.s32.totalorder %s21, 0
      %p158 = por %p156, %p157
      %p159 = scmp.le.s32.totalorder 1, %s15
      %p160 = scmp.lt.s32.totalorder %s15, 3
      %p161 = pnand %p159, %p160
      %p162 = pneg %p161
      // Predicated region
      $region9: #{tpu_custom_call.1} parent=5 // pred_check
        _
      $region10: #{tpu_custom_call.1} parent=5 // pred_check_branch
        %164 = sbr.rel (%p161) target = $region12
      $region11: #{tpu_custom_call.1} parent=5 // pred_region
        %s165 = ssub.s32 %s15, 1
        // Predicated region
        $region13: #{tpu_custom_call.1} parent=11 // pred_check
          %p166 = pneg %p62
        $region14: #{tpu_custom_call.1} parent=11 // pred_check_branch
          %168 = sbr.rel (%p166) target = $region16
        $region15: #{tpu_custom_call.1} parent=11 // pred_region
          _
        $region16: #{tpu_custom_call.1} parent=11 // pred_fallthru
          _
        // Predicated region
        $region17: #{tpu_custom_call.1} parent=11 // pred_check
          %p169 = pneg %p83
        $region18: #{tpu_custom_call.1} parent=11 // pred_check_branch
          %171 = sbr.rel (%p169) target = $region20
        $region19: #{tpu_custom_call.1} parent=11 // pred_region
          _
        $region20: #{tpu_custom_call.1} parent=11 // pred_fallthru
          _
        // Predicated region
        $region21: #{tpu_custom_call.1} parent=11 // pred_check
          %p172 = pneg %p104
        $region22: #{tpu_custom_call.1} parent=11 // pred_check_branch
          %174 = sbr.rel (%p172) target = $region24
        $region23: #{tpu_custom_call.1} parent=11 // pred_region
          %s176 = ssub.s32 2048, 2048
          %177 = vsyncadd [#allocation3], %s176
          %s178 = sshll.u32 [#allocation2], 4
          %s179 = int_to_ptr.vmem [resolvable:$true] %s178
          %184 = dma.hbm_to_vmem [thread:$0]  %s3, 2048, %s179, [#allocation3], 64, 64, 4
        $region24: #{tpu_custom_call.1} parent=11 // pred_fallthru
          _
        // Predicated region
        $region25: #{tpu_custom_call.1} parent=11 // pred_check
          %p185 = pneg %p125
        $region26: #{tpu_custom_call.1} parent=11 // pred_check_branch
          %187 = sbr.rel (%p185) target = $region28
        $region27: #{tpu_custom_call.1} parent=11 // pred_region
          _
        $region28: #{tpu_custom_call.1} parent=11 // pred_fallthru
          _
      $region12: #{tpu_custom_call.1} parent=5 // pred_fallthru
        _
      %p188 = scmp.lt.s32.totalorder %s15, 2
      // Predicated region
      $region29: #{tpu_custom_call.1} parent=5 // pred_check
        %p189 = pneg %p188
      $region30: #{tpu_custom_call.1} parent=5 // pred_check_branch
        %191 = sbr.rel (%p189) target = $region32
      $region31: #{tpu_custom_call.1} parent=5 // pred_region
        // Predicated region
        $region33: #{tpu_custom_call.1} parent=31 // pred_check
          %p192 = pneg %p35
        $region34: #{tpu_custom_call.1} parent=31 // pred_check_branch
          %194 = sbr.rel (%p192) target = $region36
        $region35: #{tpu_custom_call.1} parent=31 // pred_region
          %p195 = scmp.lt.s32.totalorder %s15, 1
          %s196 = scalar_select %p195, %s15, 1
          %s197 = smul.addr %s196, 8
          %s198 = scalar_lea.vmem %s0, %s197
        $region36: #{tpu_custom_call.1} parent=31 // pred_fallthru
          _
      $region32: #{tpu_custom_call.1} parent=5 // pred_fallthru
        _
      %p199 = scmp.le.s32.totalorder 1, %s15
      %p200 = scmp.lt.s32.totalorder %s15, 3
      %p201 = pnand %p199, %p200
      %p202 = pneg %p201
      // Predicated region
      $region37: #{tpu_custom_call.1} parent=5 // pred_check
        _
      $region38: #{tpu_custom_call.1} parent=5 // pred_check_branch
        %204 = sbr.rel (%p201) target = $region40
      $region39: #{tpu_custom_call.1} parent=5 // pred_region
        %s205 = ssub.s32 %s15, 1
        // Predicated region
        $region41: #{tpu_custom_call.1} parent=39 // pred_check
          %p206 = pneg %p104
        $region42: #{tpu_custom_call.1} parent=39 // pred_check_branch
          %208 = sbr.rel (%p206) target = $region44
        $region43: #{tpu_custom_call.1} parent=39 // pred_region
          %209 = dma.done [#allocation3], 2048
        $region44: #{tpu_custom_call.1} parent=39 // pred_fallthru
          _
        %p210 = scmp.lt.s32.totalorder %s20, 1
        %s211 = scalar_select %p210, %s20, 1
        %s212 = smul.addr %s211, 8
        %s213 = scalar_lea.vmem %s0, %s212
        %p214 = pneg %p41
        %p215 = pneg %p38
        %p216 = pneg %p62
        %p217 = pneg %p59
        %p218 = pneg %p83
        %p219 = pneg %p80
        %p220 = pneg %p104
        %p221 = pneg %p101
        %p222 = pneg %p125
        %p223 = pneg %p122
        %p224 = pneg %p151
        %p225 = pneg %p148
        %s226 = sand.u32 %s138, 1
        %s227 = scalar_lea.sflag [#allocation4], %s226
        %s228 = sand.u32 %s138, 1
        %s229 = smul.addr %s228, 8
        %s230 = scalar_lea.vmem [#allocation5], %s229
        %p231 = scmp.lt.s32.totalorder %s20, 1
        %s232 = scalar_select %p231, %s20, 1
        %s233 = smul.addr %s232, 8
        %s234 = scalar_lea.vmem %s0, %s233
        %v236 = vld [vmem:[%s234] sm:$0xff]
        %v237 = vld [vmem:[%s1] sm:$0x7f]
        %v238 = vld [vmem:[%s1 + $0x8] sm:$0x7f]
        %v239 = vld [vmem:[%s2] sm:$0x3]
        %v241 = vlaneseq
        %v242 = vshrl.u32 %v241, 7
        %v243 = vsub.s32 0, %v242
        %v244 = vrot.slane %v239, %v243
        %v245 = vlaneseq
        %v246 = vshrl.u32 %v245, 7
        %v247 = vsub.s32 1, %v246
        %v248 = vrot.slane %v239, %v247
        %vm251 = vcmask 56320
        %v253 = vsel %vm251, %v236, 0
        %vm255 = vcmask 1046528
        %v257 = vsel %vm255, %v237, 0
        %v260 = vsel %vm255, %v238, 0
        %262 = vmatprep.subr.mxu0 %v260
        %263 = vmatpush1.msra.mxu0 %v257
        %264 = vmatprep.subr.mxu0 0.0
        %265 = vmatpush1.msra.mxu0 0.0
        %266 = vmatprep.subr.mxu0 0.0
        %267 = vmatpush1.msra.mxu0 0.0
        %268 = vmatprep.subr.mxu0 0.0
        %269 = vmatpush1.msra.mxu0 0.0
        %270 = vmatprep.subr.mxu0 0.0
        %271 = vmatpush1.msra.mxu0 0.0
        %272 = vmatprep.subr.mxu0 0.0
        %273 = vmatpush1.msra.mxu0 0.0
        %274 = vmatprep.subr.mxu0 0.0
        %275 = vmatpush1.msra.mxu0 0.0
        %276 = vmatprep.subr.mxu0 0.0
        %277 = vmatpush1.msra.mxu0 0.0
        %278 = vmatprep.subr.mxu0 0.0
        %279 = vmatpush1.msra.mxu0 0.0
        %280 = vmatprep.subr.mxu0 0.0
        %281 = vmatpush1.msra.mxu0 0.0
        %282 = vmatprep.subr.mxu0 0.0
        %283 = vmatpush1.msra.mxu0 0.0
        %284 = vmatprep.subr.mxu0 0.0
        %285 = vmatpush1.msra.mxu0 0.0
        %286 = vmatprep.subr.mxu0 0.0
        %287 = vmatpush1.msra.mxu0 0.0
        %288 = vmatprep.subr.mxu0 0.0
        %289 = vmatpush1.msra.mxu0 0.0
        %290 = vmatprep.subr.mxu0 0.0
        %291 = vmatpush1.msra.mxu0 0.0
        %292 = vmatprep.subr.mxu0 0.0
        %293 = vmatpush1.msra.mxu0 0.0
        %294 = vmatprep.subr.mxu0 0.0
        %295 = vmatpush1.msra.mxu0 0.0
        %296 = vmatprep.subr.mxu0 0.0
        %297 = vmatpush1.msra.mxu0 0.0
        %298 = vmatprep.subr.mxu0 0.0
        %299 = vmatpush1.msra.mxu0 0.0
        %300 = vmatprep.subr.mxu0 0.0
        %301 = vmatpush1.msra.mxu0 0.0
        %302 = vmatprep.subr.mxu0 0.0
        %303 = vmatpush1.msra.mxu0 0.0
        %304 = vmatprep.subr.mxu0 0.0
        %305 = vmatpush1.msra.mxu0 0.0
        %306 = vmatprep.subr.mxu0 0.0
        %307 = vmatpush1.msra.mxu0 0.0
        %308 = vmatprep.subr.mxu0 0.0
        %309 = vmatpush1.msra.mxu0 0.0
        %310 = vmatprep.subr.mxu0 0.0
        %311 = vmatpush1.msra.mxu0 0.0
        %312 = vmatprep.subr.mxu0 0.0
        %313 = vmatpush1.msra.mxu0 0.0
        %314 = vmatprep.subr.mxu0 0.0
        %315 = vmatpush1.msra.mxu0 0.0
        %316 = vmatprep.subr.mxu0 0.0
        %317 = vmatpush1.msra.mxu0 0.0
        %318 = vmatprep.subr.mxu0 0.0
        %319 = vmatpush1.msra.mxu0 0.0
        %320 = vmatprep.subr.mxu0 0.0
        %321 = vmatpush1.msra.mxu0 0.0
        %322 = vmatprep.subr.mxu0 0.0
        %323 = vmatpush1.msra.mxu0 0.0
        %324 = vmatprep.subr.mxu0 0.0
        %325 = vmatpush1.msra.mxu0 0.0
        %326 = vmatprep.mubr.f32.mxu0 0.0
        %327 = vmatmul.mubr.f32.gmra.mrb[0].mxu0 %v253
        %v328 = vpop.f32.mrb[0].mxu0
        %v329 = vadd.f32 %v244, %v328
        %v330 = vpop.f32.mrb[0].mxu0
        %v331 = vadd.f32 %v248, %v330
        %332 = vdwg.mxu0
        %v333 = vmax.f32 %v329, 0.0
        %v334 = vmax.f32 %v331, 0.0
        %v335 = vpack.c.bf16 %v333, %v333
        %v336 = vpack.c.bf16 %v334, %v334
        %v337 = vld [vmem:[#allocation2] sm:$0xf]
        %v338 = vld [vmem:[#allocation2 + $0x4] sm:$0xf]
        %v339 = vld [vmem:[#allocation2 + $0x8] sm:$0xf]
        %v340 = vld [vmem:[#allocation2 + $0xc] sm:$0xf]
        %v341 = vld [vmem:[#allocation2 + $0x10] sm:$0xf]
        %v342 = vld [vmem:[#allocation2 + $0x14] sm:$0xf]
        %v343 = vld [vmem:[#allocation2 + $0x18] sm:$0xf]
        %v344 = vld [vmem:[#allocation2 + $0x1c] sm:$0xf]
        %v345 = vld [vmem:[#allocation2 + $0x20] sm:$0xf]
        %v346 = vld [vmem:[#allocation2 + $0x24] sm:$0xf]
        %v347 = vld [vmem:[#allocation2 + $0x28] sm:$0xf]
        %v348 = vld [vmem:[#allocation2 + $0x2c] sm:$0xf]
        %v349 = vld [vmem:[#allocation2 + $0x30] sm:$0xf]
        %v350 = vld [vmem:[#allocation2 + $0x34] sm:$0xf]
        %v351 = vld [vmem:[#allocation2 + $0x38] sm:$0xf]
        %v352 = vld [vmem:[#allocation2 + $0x3c] sm:$0xf]
        %v353 = vld [vmem:[#allocation2 + $0x40] sm:$0xf]
        %v354 = vld [vmem:[#allocation2 + $0x44] sm:$0xf]
        %v355 = vld [vmem:[#allocation2 + $0x48] sm:$0xf]
        %v356 = vld [vmem:[#allocation2 + $0x4c] sm:$0xf]
        %v357 = vld [vmem:[#allocation2 + $0x50] sm:$0xf]
        %v358 = vld [vmem:[#allocation2 + $0x54] sm:$0xf]
        %v359 = vld [vmem:[#allocation2 + $0x58] sm:$0xf]
        %v360 = vld [vmem:[#allocation2 + $0x5c] sm:$0xf]
        %v361 = vld [vmem:[#allocation2 + $0x60] sm:$0xf]
        %v362 = vld [vmem:[#allocation2 + $0x64] sm:$0xf]
        %v363 = vld [vmem:[#allocation2 + $0x68] sm:$0xf]
        %v364 = vld [vmem:[#allocation2 + $0x6c] sm:$0xf]
        %v365 = vld [vmem:[#allocation2 + $0x70] sm:$0xf]
        %v366 = vld [vmem:[#allocation2 + $0x74] sm:$0xf]
        %v367 = vld [vmem:[#allocation2 + $0x78] sm:$0xf]
        %v368 = vld [vmem:[#allocation2 + $0x7c] sm:$0xf]
        %v369 = vld [vmem:[%s4] sm:$0x1]
        %v371 = vlaneseq
        %v372 = vshrl.u32 %v371, 7
        %v373 = vsub.s32 0, %v372
        %v374 = vrot.slane %v369, %v373
        %v408 = vunpack.c.l.b16 %v337
        %v409 = vunpack.c.l.b16 %v338
        %v410 = vunpack.c.l.b16 %v339
        %v411 = vunpack.c.l.b16 %v340
        %v412 = vunpack.c.l.b16 %v341
        %v413 = vunpack.c.l.b16 %v342
        %v414 = vunpack.c.l.b16 %v343
        %v415 = vunpack.c.l.b16 %v344
        %v416 = vunpack.c.l.b16 %v345
        %v417 = vunpack.c.l.b16 %v346
        %v418 = vunpack.c.l.b16 %v347
        %v419 = vunpack.c.l.b16 %v348
        %v420 = vunpack.c.l.b16 %v349
        %v421 = vunpack.c.l.b16 %v350
        %v422 = vunpack.c.l.b16 %v351
        %v423 = vunpack.c.l.b16 %v352
        %v424 = vunpack.c.l.b16 %v353
        %v425 = vunpack.c.l.b16 %v354
        %v426 = vunpack.c.l.b16 %v355
        %v427 = vunpack.c.l.b16 %v356
        %v428 = vunpack.c.l.b16 %v357
        %v429 = vunpack.c.l.b16 %v358
        %v430 = vunpack.c.l.b16 %v359
        %v431 = vunpack.c.l.b16 %v360
        %v432 = vunpack.c.l.b16 %v361
        %v433 = vunpack.c.l.b16 %v362
        %v434 = vunpack.c.l.b16 %v363
        %v435 = vunpack.c.l.b16 %v364
        %v436 = vunpack.c.l.b16 %v365
        %v437 = vunpack.c.l.b16 %v366
        %v438 = vunpack.c.l.b16 %v367
        %v439 = vunpack.c.l.b16 %v368
        %v440 = vpack.c.b16 %v409, %v408
        %v441 = vpack.c.b16 %v411, %v410
        %v442 = vpack.c.b16 %v413, %v412
        %v443 = vpack.c.b16 %v415, %v414
        %v444 = vpack.c.b16 %v417, %v416
        %v445 = vpack.c.b16 %v419, %v418
        %v446 = vpack.c.b16 %v421, %v420
        %v447 = vpack.c.b16 %v423, %v422
        %v448 = vpack.c.b16 %v425, %v424
        %v449 = vpack.c.b16 %v427, %v426
        %v450 = vpack.c.b16 %v429, %v428
        %v451 = vpack.c.b16 %v431, %v430
        %v452 = vpack.c.b16 %v433, %v432
        %v453 = vpack.c.b16 %v435, %v434
        %v454 = vpack.c.b16 %v437, %v436
        %v455 = vpack.c.b16 %v439, %v438
        %472 = vmatprep.subr.bf16.mxu0 0
        %473 = vmatpush1.bf16.msra.mxu0 %v440
        %474 = vmatprep.subr.bf16.mxu0 0
        %475 = vmatpush1.bf16.msra.mxu0 %v441
        %476 = vmatprep.subr.bf16.mxu0 0
        %477 = vmatpush1.bf16.msra.mxu0 %v442
        %478 = vmatprep.subr.bf16.mxu0 0
        %479 = vmatpush1.bf16.msra.mxu0 %v443
        %480 = vmatprep.subr.bf16.mxu0 0
        %481 = vmatpush1.bf16.msra.mxu0 %v444
        %482 = vmatprep.subr.bf16.mxu0 0
        %483 = vmatpush1.bf16.msra.mxu0 %v445
        %484 = vmatprep.subr.bf16.mxu0 0
        %485 = vmatpush1.bf16.msra.mxu0 %v446
        %486 = vmatprep.subr.bf16.mxu0 0
        %487 = vmatpush1.bf16.msra.mxu0 %v447
        %488 = vmatprep.subr.bf16.mxu0 0
        %489 = vmatpush1.bf16.msra.mxu0 %v448
        %490 = vmatprep.subr.bf16.mxu0 0
        %491 = vmatpush1.bf16.msra.mxu0 %v449
        %492 = vmatprep.subr.bf16.mxu0 0
        %493 = vmatpush1.bf16.msra.mxu0 %v450
        %494 = vmatprep.subr.bf16.mxu0 0
        %495 = vmatpush1.bf16.msra.mxu0 %v451
        %496 = vmatprep.subr.bf16.mxu0 0
        %497 = vmatpush1.bf16.msra.mxu0 %v452
        %498 = vmatprep.subr.bf16.mxu0 0
        %499 = vmatpush1.bf16.msra.mxu0 %v453
        %500 = vmatprep.subr.bf16.mxu0 0
        %501 = vmatpush1.bf16.msra.mxu0 %v454
        %502 = vmatprep.subr.bf16.mxu0 0
        %503 = vmatpush1.bf16.msra.mxu0 %v455
        %504 = vmatprep.mubr.bf16.mxu0 %v336
        %505 = vmatmul.mubr.bf16.gmra.mrb[0].mxu0 %v335
        %v506 = vpop.f32.mrb[0].mxu0
        %v507 = vadd.f32 %v374, %v506
        %v508 = vpop.f32.mrb[0].mxu0
        %v509 = vpop.f32.mrb[0].mxu0
        %v510 = vpop.f32.mrb[0].mxu0
        %511 = vdwg.mxu0
        %v512 = vmax.f32 %v507, 0.0
        %513 = vst [vmem:[%s230] sm:$0xff] %v512
        %s514 = sand.u32 %s138, 1
        %s515 = scalar_lea.sflag [#allocation4], %s514
        %s516 = sand.u32 %s138, 1
        %s517 = smul.addr %s516, 8
        %s518 = scalar_lea.vmem [#allocation5], %s517
        // Predicated region
        $region45: #{tpu_custom_call.1} parent=39 // pred_check
          %p519 = pneg %p148
        $region46: #{tpu_custom_call.1} parent=39 // pred_check_branch
          %521 = sbr.rel (%p519) target = $region48
        $region47: #{tpu_custom_call.1} parent=39 // pred_region
          %s523 = ssub.s32 128, 128
          %524 = vsyncadd %s515, %s523
          %s525 = smul.addr %s20, 128
          %s526 = scalar_lea.hbm %s5, %s525
          %s528 = sshll.u32 %s518, 4
          %s529 = int_to_ptr.vmem [resolvable:$true] %s528
          %531 = dma.vmem_to_hbm [thread:$0]  %s529, 128, %s526, %s515
        $region48: #{tpu_custom_call.1} parent=39 // pred_fallthru
          _
      $region40: #{tpu_custom_call.1} parent=5 // pred_fallthru
        _
      %p532 = scmp.le.s32.totalorder 2, %s15
      // Predicated region
      $region49: #{tpu_custom_call.1} parent=5 // pred_check
        %p533 = pneg %p532
      $region50: #{tpu_custom_call.1} parent=5 // pred_check_branch
        %535 = sbr.rel (%p533) target = $region52
      $region51: #{tpu_custom_call.1} parent=5 // pred_region
        %s536 = ssub.s32 %s15, 2
        // Predicated region
        $region53: #{tpu_custom_call.1} parent=51 // pred_check
          %p537 = pneg %p154
        $region54: #{tpu_custom_call.1} parent=51 // pred_check_branch
          %539 = sbr.rel (%p537) target = $region56
        $region55: #{tpu_custom_call.1} parent=51 // pred_region
          %s540 = sand.u32 %s139, 1
          %s541 = scalar_lea.sflag [#allocation4], %s540
          %s542 = sand.u32 %s139, 1
          %s543 = smul.addr %s542, 8
          %s544 = scalar_lea.vmem [#allocation5], %s543
          %545 = dma.done %s541, 128
        $region56: #{tpu_custom_call.1} parent=51 // pred_fallthru
          _
      $region52: #{tpu_custom_call.1} parent=5 // pred_fallthru
        _
    $region6: #{tpu_custom_call.1} parent=1 // loop_footer
      %s19 = sadd.s32 1, %s15
    $region7: #{tpu_custom_call.1} parent=1 // loop_footer_branch
      %14 = sbr.rel target = $region3
    $region8: #{tpu_custom_call.1} parent=1 // loop_exit
      _
    %546 = vsyncpa [#allocation3], 1
    %s547 = scalar_lea.sflag [#allocation3], 1
    %548 = vsyncpa %s547, 1
    %549 = vsyncpa [#allocation4], 1
    %s550 = scalar_lea.sflag [#allocation4], 1
    %551 = vsyncpa %s550, 1

</llo_original>
